<compile_context>
chip_gen: v7x
topology: tpu7x:2x2x1
jax: 0.10.0
libtpu: 0.0.40
codegen_flags: <defaults>
</compile_context>

<pallas_src>
import functools

import jax
import jax.numpy as jnp
from jax import lax
from jax.experimental import pallas as pl
from jax.experimental.pallas import tpu as pltpu


def _adain_kernel(x_ref, a_ref, g_ref, o_ref, *, eps, inv_s):
    """One block of rows: x_ref (R, S); a_ref / g_ref (R, 1) per-row scalars."""
    # Pass 1: streaming row statistics in f32 (sum and sum of squares); no centered
    # `xc` temporary.  One-pass variance var = E[x^2] - mean^2 can cancel when
    # |mean| >> std; for activation statistics this is fine, and we clamp at 0.
    x = x_ref[...].astype(jnp.float32)
    row_sum = jnp.sum(x, axis=-1, keepdims=True)              # (R, 1)
    row_sumsq = jnp.sum(x * x, axis=-1, keepdims=True)        # (R, 1)
    mean = row_sum * inv_s
    var = jnp.maximum(row_sumsq * inv_s - mean * mean, 0.0)   # biased var, like InstanceNorm2d
    inv_std = lax.rsqrt(var + eps)                            # EUP rsqrt, no VPU divide

    alpha = a_ref[...].astype(jnp.float32)                    # (R, 1)
    gamma = g_ref[...].astype(jnp.float32)                    # (R, 1)
    scale = alpha * inv_std                                   # fold alpha into the inv-std scalar
    shift = gamma - scale * mean                              # fold mean subtraction into the bias

    # Pass 2: re-read the tile and apply exactly one multiply + one add per element.
    o_ref[...] = (x_ref[...].astype(jnp.float32) * scale + shift).astype(o_ref.dtype)


def _round_up(v, m):
    return (v + m - 1) // m * m


def _sublane_granule(dtype):
    # Sub-32-bit dtypes pack along sublanes: native row granule is 8 (f32), 16 (bf16),
    # 32 (int8 / fp8).
    return max(8, 32 // jnp.dtype(dtype).itemsize)


def _pick_row_block(nc, s, dtype):
    gran = _sublane_granule(dtype)
    itemsize = jnp.dtype(dtype).itemsize
    # ~4 MiB of x per block: double-buffered in/out tiles plus in-kernel f32 temporaries
    # stay around 16-24 MiB, well inside the explicit 48 MiB VMEM limit on every
    # generation (v5e/v6e: 128 MiB physical, v7x: 64 MiB per TensorCore).
    budget_bytes = 4 * 1024 * 1024
    rows = budget_bytes // max(int(s) * itemsize, 1)
    rows = max(gran, (rows // gran) * gran)
    # Cap so the grid has >= 2 steps when possible: with dimension_semantics=("parallel",)
    # this lets v7x's two TensorCores both get work (no-op on single-core v5e/v6e).
    rows = min(rows, max(gran, _round_up(pl.cdiv(nc, 2), gran)))
    # No point exceeding the (rounded-up) number of rows.
    rows = min(rows, _round_up(nc, gran))
    # TODO(synk): for very large spatial maps where even `gran` rows exceed the VMEM
    # budget, add a second grid axis over S with partial sum/sumsq accumulators.
    return int(rows)


def adain(x, alpha, gamma, *, eps=1e-5):
    """x: [N, C, H, W]; alpha, gamma: [N, C, 1, 1]. Matches AdaIN.forward."""
    n, c, h, w = x.shape
    assert x.shape[:2] == alpha.shape[:2] == gamma.shape[:2]

    nc = n * c
    s = h * w

    a2 = alpha.reshape(nc, -1)
    g2 = gamma.reshape(nc, -1)
    # TODO(synk): only per-(N, C) scalar alpha/gamma are supported (the standard AdaIN
    # shape [N, C, 1, 1]); full spatial alpha/gamma would need (R, S) blocks instead.
    assert a2.shape[-1] == 1 and g2.shape[-1] == 1, "expected alpha/gamma of shape [N, C, 1, 1]"

    # (N*C, H*W): each row is one (sample, channel) instance; the spatial axis sits on
    # the lane dimension so reductions and output stores are lane-dense.  The reshape
    # is a layout-preserving bitcast (no HBM copy).  When s is not a multiple of 128
    # only the tail vreg of each row's store is masked; acceptable for typical sizes.
    x2 = x.reshape(nc, s)

    r_blk = _pick_row_block(nc, s, x.dtype)
    grid = (pl.cdiv(nc, r_blk),)   # no padding: Pallas masks the tail block's OOB rows

    kernel = functools.partial(_adain_kernel, eps=float(eps), inv_s=1.0 / float(s))

    out = pl.pallas_call(
        kernel,
        out_shape=jax.ShapeDtypeStruct((nc, s), x.dtype),
        grid_spec=pltpu.PrefetchScalarGridSpec(
            num_scalar_prefetch=0,
            grid=grid,
            in_specs=[
                pl.BlockSpec((r_blk, s), lambda i: (i, 0)),
                pl.BlockSpec((r_blk, 1), lambda i: (i, 0)),
                pl.BlockSpec((r_blk, 1), lambda i: (i, 0)),
            ],
            out_specs=pl.BlockSpec((r_blk, s), lambda i: (i, 0)),
        ),
        compiler_params=pltpu.CompilerParams(
            dimension_semantics=("parallel",),
            vmem_limit_bytes=48 * 1024 * 1024,
        ),
    )(x2, a2, g2)

    return out.reshape(n, c, h, w)


def _reference(x, alpha, gamma, eps=1e-5):
    """Pure-JAX reference mirroring InstanceNorm2d(affine=False) + alpha*norm + gamma."""
    mean = jnp.mean(x, axis=(2, 3), keepdims=True)
    var = jnp.var(x, axis=(2, 3), keepdims=True)           # biased, like PyTorch InstanceNorm2d
    norm = (x - mean) / jnp.sqrt(var + eps)
    return alpha * norm + gamma


if __name__ == "__main__":
    n, c, h, w = 2, 4, 16, 16

    key = jax.random.PRNGKey(0)
    kx, ka, kg = jax.random.split(key, 3)
    x = jax.random.normal(kx, (n, c, h, w), dtype=jnp.float32)
    alpha = jax.random.normal(ka, (n, c, 1, 1), dtype=jnp.float32)
    gamma = jax.random.normal(kg, (n, c, 1, 1), dtype=jnp.float32)

    out = adain(x, alpha, gamma)
    out = jax.block_until_ready(out)

    ref = _reference(x, alpha, gamma)
    assert out.shape == x.shape, out.shape
    assert jnp.allclose(out, ref, atol=1e-4, rtol=1e-4), "mismatch vs reference"

    print("KERNEL_OK")
</pallas_src>

<mosaic_0001>
module attributes {stable_mosaic.version = 11 : i64} {
  func.func @_adain_kernel(%arg0: i32, %arg1: memref<8x256xf32, #tpu.memory_space<vmem>>, %arg2: memref<8x1xf32, #tpu.memory_space<vmem>>, %arg3: memref<8x1xf32, #tpu.memory_space<vmem>>, %arg4: memref<8x256xf32, #tpu.memory_space<vmem>>) attributes {dimension_semantics = [#tpu.dimension_semantics<parallel>], iteration_bounds = array<i64: 1>, scalar_prefetch = 0 : i64, scratch_operands = 0 : i64, tpu.core_type = #tpu.core_type<tc>, window_params = [{transform_indices = @transform_0, window_bounds = array<i64: 8, 256>}, {transform_indices = @transform_1, window_bounds = array<i64: 8, 1>}, {transform_indices = @transform_2, window_bounds = array<i64: 8, 1>}, {transform_indices = @transform_3, window_bounds = array<i64: 8, 256>}]} {
    %c0 = arith.constant 0 : index
    %c0_0 = arith.constant 0 : index
    %0 = vector.load %arg1[%c0, %c0_0] : memref<8x256xf32, #tpu.memory_space<vmem>>, vector<8x256xf32>
    %cst = arith.constant dense<0.000000e+00> : vector<8xf32>
    %1 = vector.multi_reduction <add>, %0, %cst [1] : vector<8x256xf32> to vector<8xf32>
    %2 = vector.shape_cast %1 : vector<8xf32> to vector<8x1xf32>
    %3 = arith.mulf %0, %0 : vector<8x256xf32>
    %cst_1 = arith.constant dense<0.000000e+00> : vector<8xf32>
    %4 = vector.multi_reduction <add>, %3, %cst_1 [1] : vector<8x256xf32> to vector<8xf32>
    %5 = vector.shape_cast %4 : vector<8xf32> to vector<8x1xf32>
    %cst_2 = arith.constant 3.906250e-03 : f32
    %6 = vector.broadcast %cst_2 : f32 to vector<8x1xf32>
    %7 = arith.mulf %2, %6 : vector<8x1xf32>
    %cst_3 = arith.constant 3.906250e-03 : f32
    %8 = vector.broadcast %cst_3 : f32 to vector<8x1xf32>
    %9 = arith.mulf %5, %8 : vector<8x1xf32>
    %10 = arith.mulf %7, %7 : vector<8x1xf32>
    %11 = arith.subf %9, %10 : vector<8x1xf32>
    %cst_4 = arith.constant 0.000000e+00 : f32
    %12 = vector.broadcast %cst_4 : f32 to vector<8x1xf32>
    %13 = arith.maximumf %11, %12 : vector<8x1xf32>
    %cst_5 = arith.constant 9.99999974E-6 : f32
    %14 = vector.broadcast %cst_5 : f32 to vector<8x1xf32>
    %15 = arith.addf %13, %14 : vector<8x1xf32>
    %16 = math.rsqrt %15 : vector<8x1xf32>
    %c0_6 = arith.constant 0 : index
    %c0_7 = arith.constant 0 : index
    %17 = vector.load %arg2[%c0_6, %c0_7] : memref<8x1xf32, #tpu.memory_space<vmem>>, vector<8x1xf32>
    %c0_8 = arith.constant 0 : index
    %c0_9 = arith.constant 0 : index
    %18 = vector.load %arg3[%c0_8, %c0_9] : memref<8x1xf32, #tpu.memory_space<vmem>>, vector<8x1xf32>
    %19 = arith.mulf %17, %16 : vector<8x1xf32>
    %20 = arith.mulf %19, %7 : vector<8x1xf32>
    %21 = arith.subf %18, %20 : vector<8x1xf32>
    %c0_10 = arith.constant 0 : index
    %c0_11 = arith.constant 0 : index
    %22 = vector.load %arg1[%c0_10, %c0_11] : memref<8x256xf32, #tpu.memory_space<vmem>>, vector<8x256xf32>
    %23 = vector.broadcast %19 : vector<8x1xf32> to vector<8x256xf32>
    %24 = arith.mulf %22, %23 : vector<8x256xf32>
    %25 = vector.broadcast %21 : vector<8x1xf32> to vector<8x256xf32>
    %26 = arith.addf %24, %25 : vector<8x256xf32>
    %c0_12 = arith.constant 0 : index
    %c0_13 = arith.constant 0 : index
    %27 = vector.load %arg4[%c0_12, %c0_13] : memref<8x256xf32, #tpu.memory_space<vmem>>, vector<8x256xf32>
    tpu.vector_store %arg4[%c0_12, %c0_13], %26 {strides = array<i32>} : memref<8x256xf32, #tpu.memory_space<vmem>>, vector<8x256xf32>,
    return
  }
  func.func @transform_0(%arg0: i32) -> (i32, i32) {
    %c0_i32 = arith.constant 0 : i32
    %c0_i32_0 = arith.constant 0 : i32
    return %arg0, %c0_i32 : i32, i32
  }
  func.func @transform_1(%arg0: i32) -> (i32, i32) {
    %c0_i32 = arith.constant 0 : i32
    %c0_i32_0 = arith.constant 0 : i32
    return %arg0, %c0_i32 : i32, i32
  }
  func.func @transform_2(%arg0: i32) -> (i32, i32) {
    %c0_i32 = arith.constant 0 : i32
    %c0_i32_0 = arith.constant 0 : i32
    return %arg0, %c0_i32 : i32, i32
  }
  func.func @transform_3(%arg0: i32) -> (i32, i32) {
    %c0_i32 = arith.constant 0 : i32
    %c0_i32_0 = arith.constant 0 : i32
    return %arg0, %c0_i32 : i32, i32
  }
}

</mosaic_0001>

<llo_original>
// kernel: tpu_custom_call.1
$region0: #{tpu_custom_call.1}
  #allocation0 [shape = 'u32[]', space=smem, size = 0x4, offset = 0x4, fixed_abs, tag = 'smem constant byte address 0x4 - core index']
  #allocation1 [shape = 'u32[144,128]{1,0:T(1,128)}', space=vmem, size = 0x12000, scoped, tag = 'internal scratch']
  %s0 = inlined_call_operand.vmem [shape: f32[8,256], index: 0, kind: input, shape index: {}]
  %s1 = inlined_call_operand.vmem [shape: f32[8,1], index: 1, kind: input, shape index: {}]
  %s2 = inlined_call_operand.vmem [shape: f32[8,1], index: 2, kind: input, shape index: {}]
  %s3 = inlined_call_operand.hbm [shape: f32[8,256], index: 3, kind: output, shape index: {}]
  %s4 = sld [smem:[#allocation0]]
  $region22: #{tpu_custom_call.1} parent=0
    _
  %s6 = ssub.s32 1, %s4
  %s7 = scalar_select 0, %s6, %s4
  $region1: #{tpu_custom_call.1} parent=0
    #allocation2 [shape = 'u8[8192]{0}', space=vmem, size = 0x2000, scoped, tag = 'output window, operand 0, single buffered']
    #allocation3 [shape = 's32[1]{0}', space=sflag, size = 0x4, scoped, tag = 'scoped memory for tpu_custom_call.1']
    %8 = vsyncpa [#allocation3], 0
    // Predicated region
    $region2: #{tpu_custom_call.1} parent=1 // pred_check
      _
    $region3: #{tpu_custom_call.1} parent=1 // pred_check_branch
      %10 = sbr.rel (0) target = $region5
    $region4: #{tpu_custom_call.1} parent=1 // pred_region
      _
    $region5: #{tpu_custom_call.1} parent=1 // pred_fallthru
      _
    // Predicated region
    $region6: #{tpu_custom_call.1} parent=1 // pred_check
      _
    $region7: #{tpu_custom_call.1} parent=1 // pred_check_branch
      %12 = sbr.rel (0) target = $region9
    $region8: #{tpu_custom_call.1} parent=1 // pred_region
      _
    $region9: #{tpu_custom_call.1} parent=1 // pred_fallthru
      _
    // Predicated region
    $region10: #{tpu_custom_call.1} parent=1 // pred_check
      _
    $region11: #{tpu_custom_call.1} parent=1 // pred_check_branch
      %14 = sbr.rel (0) target = $region13
    $region12: #{tpu_custom_call.1} parent=1 // pred_region
      _
    $region13: #{tpu_custom_call.1} parent=1 // pred_fallthru
      _
    %v15 = vld [vmem:[%s0] sm:$0xff]
    %v16 = vld [vmem:[%s0 + $0x8] sm:$0xff]
    %v17 = vadd.f32 %v15, %v16
    %18 = vadd.xlane.f32.xlu0 %v17
    %v19 = vpop.xlane.xlu0 %18
    %v20 = vmul.f32 %v15, %v15
    %v21 = vmul.f32 %v16, %v16
    %v22 = vadd.f32 %v20, %v21
    %23 = vadd.xlane.f32.xlu0 %v22
    %v24 = vpop.xlane.xlu0 %23
    %v25 = vmul.f32 %v19, 0.00390625
    %v26 = vmul.f32 %v24, 0.00390625
    %v27 = vmul.f32 %v25, %v25
    %v28 = vsub.f32 %v26, %v27
    %v29 = vmax.f32 %v28, 0.0
    %v30 = vadd.f32 %v29, 1e-05
    %v31 = vrsqrt.pop %v30
    %v32 = vld [vmem:[%s1] sm:$0xff]
    %v33 = vld [vmem:[%s2] sm:$0xff]
    %v34 = vmul.f32 %v32, %v31
    %v35 = vmul.f32 %v34, %v25
    %v36 = vsub.f32 %v33, %v35
    %38 = vset.pattern.permute.xlu0 0
    %39 = vperm.xlu0 %38, %v34
    %v40 = vpop.permute.xlu0 %39
    %v42 = vmul.f32 %v15, %v40
    %v43 = vmul.f32 %v16, %v40
    %45 = vset.pattern.permute.xlu0 0
    %46 = vperm.xlu0 %45, %v36
    %v47 = vpop.permute.xlu0 %46
    %v49 = vadd.f32 %v42, %v47
    %v50 = vadd.f32 %v43, %v47
    %51 = vst [vmem:[#allocation2] sm:$0xff] %v49
    %52 = vst [vmem:[#allocation2 + $0x8] sm:$0xff] %v50
    // Predicated region
    $region14: #{tpu_custom_call.1} parent=1 // pred_check
      _
    $region15: #{tpu_custom_call.1} parent=1 // pred_check_branch
      %54 = sbr.rel (0) target = $region17
    $region16: #{tpu_custom_call.1} parent=1 // pred_region
      %s56 = ssub.s32 256, 256
      %57 = vsyncadd [#allocation3], %s56
      %s59 = sshll.u32 [#allocation2], 4
      %s60 = int_to_ptr.vmem [resolvable:$true] %s59
      %62 = dma.vmem_to_hbm [thread:$0]  %s60, 256, %s3, [#allocation3]
    $region17: #{tpu_custom_call.1} parent=1 // pred_fallthru
      _
    // Predicated region
    $region18: #{tpu_custom_call.1} parent=1 // pred_check
      _
    $region19: #{tpu_custom_call.1} parent=1 // pred_check_branch
      %64 = sbr.rel (0) target = $region21
    $region20: #{tpu_custom_call.1} parent=1 // pred_region
      %65 = dma.done [#allocation3], 256
    $region21: #{tpu_custom_call.1} parent=1 // pred_fallthru
      _
    %66 = vsyncpa [#allocation3], 1

</llo_original>
